<compile_context>
chip_gen: v5e
topology: v5e:2x2
jax: 0.10.0
libtpu: 0.0.40
codegen_flags: <defaults>
</compile_context>

<pallas_src>
import functools

import jax
import jax.numpy as jnp
from jax import lax
from jax.experimental import pallas as pl
from jax.experimental.pallas import tpu as pltpu

EPS = 1e-5


def _bn_kernel(x_ref, gamma_ref, beta_ref, o_ref, *, inv_l):
    # x_ref: (N, C_TILE, HW); gamma_ref/beta_ref: (1, C_TILE, 1)
    x = x_ref[...].astype(jnp.float32)
    # Single-pass per-channel statistics (reduce over batch and spatial axes).
    s = jnp.sum(x, axis=(0, 2), keepdims=True)          # (1, C_TILE, 1)
    sq = jnp.sum(x * x, axis=(0, 2), keepdims=True)     # (1, C_TILE, 1)
    mean = s * inv_l
    var = sq * inv_l - mean * mean                       # biased variance (training mode)
    inv_std = lax.rsqrt(var + EPS)
    # Fold per-channel scalars -> single FMA per element below.
    scale = gamma_ref[...].astype(jnp.float32) * inv_std
    shift = beta_ref[...].astype(jnp.float32) - mean * scale
    o_ref[...] = (x * scale + shift).astype(o_ref.dtype)


def batchnorm2d(x_nchw, gamma, beta, *, c_tile=64):
    """BatchNorm2d forward (training-mode statistics, affine) via Pallas TPU.

    x_nchw: (N, C, H, W); gamma, beta: (C,). Returns (N, C, H, W).
    """
    N, C, H, W = x_nchw.shape
    HW = H * W
    L = N * HW  # true element count per channel (divisor for the statistics)

    # Free reshapes only; no materialized transposes around the kernel.
    x3d = x_nchw.reshape(N, C, HW)
    gamma3d = gamma.reshape(1, C, 1)
    beta3d = beta.reshape(1, C, 1)

    # Channel tile: multiple of 8 (sublane), or the full C if C is small.
    if C <= c_tile:
        ct = C
    else:
        ct = max(8, (c_tile // 8) * 8)
    grid = (pl.cdiv(C, ct),)

    kernel = functools.partial(_bn_kernel, inv_l=1.0 / float(L))

    itemsize = jnp.dtype(x_nchw.dtype).itemsize
    cost = pl.CostEstimate(
        flops=5 * N * C * HW,                      # x*x, 2 reduce-adds, fma
        transcendentals=C,                         # rsqrt per channel
        bytes_accessed=2 * N * C * HW * itemsize + 2 * C * 4,
    )

    out3d = pl.pallas_call(
        kernel,
        out_shape=jax.ShapeDtypeStruct((N, C, HW), x_nchw.dtype),
        grid=grid,
        in_specs=[
            pl.BlockSpec((N, ct, HW), lambda c: (0, c, 0)),
            pl.BlockSpec((1, ct, 1), lambda c: (0, c, 0)),
            pl.BlockSpec((1, ct, 1), lambda c: (0, c, 0)),
        ],
        out_specs=pl.BlockSpec((N, ct, HW), lambda c: (0, c, 0)),
        compiler_params=pltpu.CompilerParams(
            dimension_semantics=("parallel",),
        ),
        cost_estimate=cost,
    )(x3d, gamma3d, beta3d)

    # TODO(synk): running_mean/running_var (track_running_stats) are not updated;
    # only the forward output of BatchNorm2d in training mode is produced.
    return out3d.reshape(N, C, H, W)


if __name__ == "__main__":
    key = jax.random.PRNGKey(0)
    N, C, H, W = 1, 244, 14, 14  # matches the PyTorch module's input
    x = jax.random.normal(key, (N, C, H, W), dtype=jnp.float32)

    # BatchNorm2d(244, affine=True) init: weight = 1, bias = 0
    gamma = jnp.ones((C,), dtype=jnp.float32)
    beta = jnp.zeros((C,), dtype=jnp.float32)

    out = batchnorm2d(x, gamma, beta)
    out = jax.block_until_ready(out)

    # Plain-JAX reference (training-mode batch norm, biased variance).
    mean = jnp.mean(x, axis=(0, 2, 3), keepdims=True)
    var = jnp.mean((x - mean) ** 2, axis=(0, 2, 3), keepdims=True)
    ref = (x - mean) / jnp.sqrt(var + EPS) * gamma.reshape(1, C, 1, 1) + beta.reshape(1, C, 1, 1)
    assert out.shape == (N, C, H, W)
    assert jnp.max(jnp.abs(out - ref)) < 1e-4

    print("KERNEL_OK")
</pallas_src>

<mosaic_0001>
module attributes {stable_mosaic.version = 11 : i64} {
  func.func @_bn_kernel(%arg0: i32, %arg1: memref<1x64x196xf32, #tpu.memory_space<vmem>>, %arg2: memref<1x64x1xf32, #tpu.memory_space<vmem>>, %arg3: memref<1x64x1xf32, #tpu.memory_space<vmem>>, %arg4: memref<1x64x196xf32, #tpu.memory_space<vmem>>) attributes {dimension_semantics = [#tpu.dimension_semantics<parallel>], iteration_bounds = array<i64: 4>, scalar_prefetch = 0 : i64, scratch_operands = 0 : i64, tpu.core_type = #tpu.core_type<tc>, window_params = [{transform_indices = @transform_0, window_bounds = array<i64: 1, 64, 196>}, {transform_indices = @transform_1, window_bounds = array<i64: 1, 64, 1>}, {transform_indices = @transform_2, window_bounds = array<i64: 1, 64, 1>}, {transform_indices = @transform_3, window_bounds = array<i64: 1, 64, 196>}]} {
    %c0 = arith.constant 0 : index
    %c0_0 = arith.constant 0 : index
    %c0_1 = arith.constant 0 : index
    %0 = vector.load %arg1[%c0, %c0_0, %c0_1] : memref<1x64x196xf32, #tpu.memory_space<vmem>>, vector<1x64x196xf32>
    %cst = arith.constant dense<0.000000e+00> : vector<64xf32>
    %1 = vector.multi_reduction <add>, %0, %cst [0, 2] : vector<1x64x196xf32> to vector<64xf32>
    %2 = vector.shape_cast %1 : vector<64xf32> to vector<1x64x1xf32>
    %3 = arith.mulf %0, %0 : vector<1x64x196xf32>
    %cst_2 = arith.constant dense<0.000000e+00> : vector<64xf32>
    %4 = vector.multi_reduction <add>, %3, %cst_2 [0, 2] : vector<1x64x196xf32> to vector<64xf32>
    %5 = vector.shape_cast %4 : vector<64xf32> to vector<1x64x1xf32>
    %cst_3 = arith.constant 0.00510204071 : f32
    %6 = vector.broadcast %cst_3 : f32 to vector<1x64x1xf32>
    %7 = arith.mulf %2, %6 : vector<1x64x1xf32>
    %cst_4 = arith.constant 0.00510204071 : f32
    %8 = vector.broadcast %cst_4 : f32 to vector<1x64x1xf32>
    %9 = arith.mulf %5, %8 : vector<1x64x1xf32>
    %10 = arith.mulf %7, %7 : vector<1x64x1xf32>
    %11 = arith.subf %9, %10 : vector<1x64x1xf32>
    %cst_5 = arith.constant 9.99999974E-6 : f32
    %12 = vector.broadcast %cst_5 : f32 to vector<1x64x1xf32>
    %13 = arith.addf %11, %12 : vector<1x64x1xf32>
    %14 = math.rsqrt %13 : vector<1x64x1xf32>
    %c0_6 = arith.constant 0 : index
    %c0_7 = arith.constant 0 : index
    %c0_8 = arith.constant 0 : index
    %15 = vector.load %arg2[%c0_6, %c0_7, %c0_8] : memref<1x64x1xf32, #tpu.memory_space<vmem>>, vector<1x64x1xf32>
    %16 = arith.mulf %15, %14 : vector<1x64x1xf32>
    %c0_9 = arith.constant 0 : index
    %c0_10 = arith.constant 0 : index
    %c0_11 = arith.constant 0 : index
    %17 = vector.load %arg3[%c0_9, %c0_10, %c0_11] : memref<1x64x1xf32, #tpu.memory_space<vmem>>, vector<1x64x1xf32>
    %18 = arith.mulf %7, %16 : vector<1x64x1xf32>
    %19 = arith.subf %17, %18 : vector<1x64x1xf32>
    %20 = vector.broadcast %16 : vector<1x64x1xf32> to vector<1x64x196xf32>
    %21 = arith.mulf %0, %20 : vector<1x64x196xf32>
    %22 = vector.broadcast %19 : vector<1x64x1xf32> to vector<1x64x196xf32>
    %23 = arith.addf %21, %22 : vector<1x64x196xf32>
    %c0_12 = arith.constant 0 : index
    %c0_13 = arith.constant 0 : index
    %c0_14 = arith.constant 0 : index
    %24 = vector.load %arg4[%c0_12, %c0_13, %c0_14] : memref<1x64x196xf32, #tpu.memory_space<vmem>>, vector<1x64x196xf32>
    tpu.vector_store %arg4[%c0_12, %c0_13, %c0_14], %23 {strides = array<i32>} : memref<1x64x196xf32, #tpu.memory_space<vmem>>, vector<1x64x196xf32>,
    return
  }
  func.func @transform_0(%arg0: i32) -> (i32, i32, i32) {
    %c0_i32 = arith.constant 0 : i32
    %c0_i32_0 = arith.constant 0 : i32
    %c0_i32_1 = arith.constant 0 : i32
    return %c0_i32, %arg0, %c0_i32_0 : i32, i32, i32
  }
  func.func @transform_1(%arg0: i32) -> (i32, i32, i32) {
    %c0_i32 = arith.constant 0 : i32
    %c0_i32_0 = arith.constant 0 : i32
    %c0_i32_1 = arith.constant 0 : i32
    return %c0_i32, %arg0, %c0_i32_0 : i32, i32, i32
  }
  func.func @transform_2(%arg0: i32) -> (i32, i32, i32) {
    %c0_i32 = arith.constant 0 : i32
    %c0_i32_0 = arith.constant 0 : i32
    %c0_i32_1 = arith.constant 0 : i32
    return %c0_i32, %arg0, %c0_i32_0 : i32, i32, i32
  }
  func.func @transform_3(%arg0: i32) -> (i32, i32, i32) {
    %c0_i32 = arith.constant 0 : i32
    %c0_i32_0 = arith.constant 0 : i32
    %c0_i32_1 = arith.constant 0 : i32
    return %c0_i32, %arg0, %c0_i32_0 : i32, i32, i32
  }
}

</mosaic_0001>

<llo_original>
// kernel: tpu_custom_call.1
$region0: #{tpu_custom_call.1}
  #allocation0 [shape = 'u32[]', space=smem, size = 0x4, offset = 0x4, fixed_abs, tag = 'smem constant byte address 0x4 - core index']
  #allocation1 [shape = 'u32[72,128]{1,0:T(1,128)}', space=vmem, size = 0x9000, scoped, tag = 'internal scratch']
  %s0 = inlined_call_operand.vmem [shape: f32[1,244,196], index: 0, kind: input, shape index: {}]
  %s1 = inlined_call_operand.vmem [shape: f32[1,244,1], index: 1, kind: input, shape index: {}]
  %s2 = inlined_call_operand.vmem [shape: f32[1,244,1], index: 2, kind: input, shape index: {}]
  %s3 = inlined_call_operand.vmem [shape: f32[1,244,196], index: 3, kind: output, shape index: {}]
  %s4 = sld [smem:[#allocation0]]
  $region71: #{tpu_custom_call.1} parent=0
    _
  %s6 = ssub.s32 1, %s4
  %s7 = scalar_select 0, %s6, %s4
  $region1: #{tpu_custom_call.1} parent=0
    #allocation2 [shape = 'u8[131072]{0}', space=vmem, size = 0x20000, scoped, tag = 'output window, operand 0']
    loop: start=0, step=1, limit=6
    $region2: #{tpu_custom_call.1} parent=1 // loop_pre_header
      _
    $region3: #{tpu_custom_call.1} parent=1 // loop_header
      %s9 = sphi 0, %s13
      %p10 = scmp.ge.s32.totalorder %s9, 6
      %s19 = sphi 0, %s21
      %s22 = sphi 0, %s19
      %s23 = sphi 0, %s22
      %s39 = sphi 0, %s23
      %s45 = sphi 0, %s47
      %s48 = sphi 0, %s45
      %s49 = sphi 0, %s48
      %s65 = sphi 0, %s49
      %s71 = sphi 0, %s73
      %s74 = sphi 0, %s71
      %s75 = sphi 0, %s74
      %s91 = sphi 0, %s75
      %s97 = sphi 0, %s99
      %s100 = sphi 0, %s97
      %s101 = sphi 0, %s100
      %s117 = sphi 0, %s101
    $region4: #{tpu_custom_call.1} parent=1 // loop_header_branch
      %12 = sbr.rel (%p10) target = $region8
    $region5: #{tpu_custom_call.1} parent=1 // loop_body
      %s14 = ssub.s32 %s9, 1
      %s15 = ssub.s32 %s9, 2
      %s16 = sadd.s32 %s9, 1
      %s17 = ssub.s32 %s9, %s16
      %p18 = scmp.eq.s32.totalorder %s17, 0
      %s20 = sadd.s32 %s19, 1
      %s21 = scalar_select %p18, %s19, %s20
      %p24 = pneg %p18
      %p25 = scmp.eq.s32.totalorder %s9, 3
      %p26 = por %p24, %p25
      %p27 = scmp.ne.s32.totalorder %s19, %s22
      %p28 = scmp.eq.s32.totalorder %s9, 0
      %p29 = por %p27, %p28
      %p30 = scmp.ne.s32.totalorder %s19, %s22
      %p31 = scmp.eq.s32.totalorder %s14, 3
      %p32 = por %p30, %p31
      %p33 = scmp.ne.s32.totalorder %s22, %s23
      %p34 = scmp.eq.s32.totalorder %s14, 0
      %p35 = por %p33, %p34
      %p36 = scmp.ne.s32.totalorder %s22, %s23
      %p37 = scmp.eq.s32.totalorder %s15, 3
      %p38 = por %p36, %p37
      %p40 = scmp.ne.s32.totalorder %s23, %s39
      %p41 = scmp.eq.s32.totalorder %s15, 0
      %p42 = por %p40, %p41
      %s43 = ssub.s32 %s9, %s16
      %p44 = scmp.eq.s32.totalorder %s43, 0
      %s46 = sadd.s32 %s45, 1
      %s47 = scalar_select %p44, %s45, %s46
      %p50 = pneg %p44
      %p51 = scmp.eq.s32.totalorder %s9, 3
      %p52 = por %p50, %p51
      %p53 = scmp.ne.s32.totalorder %s45, %s48
      %p54 = scmp.eq.s32.totalorder %s9, 0
      %p55 = por %p53, %p54
      %p56 = scmp.ne.s32.totalorder %s45, %s48
      %p57 = scmp.eq.s32.totalorder %s14, 3
      %p58 = por %p56, %p57
      %p59 = scmp.ne.s32.totalorder %s48, %s49
      %p60 = scmp.eq.s32.totalorder %s14, 0
      %p61 = por %p59, %p60
      %p62 = scmp.ne.s32.totalorder %s48, %s49
      %p63 = scmp.eq.s32.totalorder %s15, 3
      %p64 = por %p62, %p63
      %p66 = scmp.ne.s32.totalorder %s49, %s65
      %p67 = scmp.eq.s32.totalorder %s15, 0
      %p68 = por %p66, %p67
      %s69 = ssub.s32 %s9, %s16
      %p70 = scmp.eq.s32.totalorder %s69, 0
      %s72 = sadd.s32 %s71, 1
      %s73 = scalar_select %p70, %s71, %s72
      %p76 = pneg %p70
      %p77 = scmp.eq.s32.totalorder %s9, 3
      %p78 = por %p76, %p77
      %p79 = scmp.ne.s32.totalorder %s71, %s74
      %p80 = scmp.eq.s32.totalorder %s9, 0
      %p81 = por %p79, %p80
      %p82 = scmp.ne.s32.totalorder %s71, %s74
      %p83 = scmp.eq.s32.totalorder %s14, 3
      %p84 = por %p82, %p83
      %p85 = scmp.ne.s32.totalorder %s74, %s75
      %p86 = scmp.eq.s32.totalorder %s14, 0
      %p87 = por %p85, %p86
      %p88 = scmp.ne.s32.totalorder %s74, %s75
      %p89 = scmp.eq.s32.totalorder %s15, 3
      %p90 = por %p88, %p89
      %p92 = scmp.ne.s32.totalorder %s75, %s91
      %p93 = scmp.eq.s32.totalorder %s15, 0
      %p94 = por %p92, %p93
      %s95 = ssub.s32 %s9, %s16
      %p96 = scmp.eq.s32.totalorder %s95, 0
      %s98 = sadd.s32 %s97, 1
      %s99 = scalar_select %p96, %s97, %s98
      %p102 = pneg %p96
      %p103 = scmp.eq.s32.totalorder %s9, 3
      %p104 = por %p102, %p103
      %p105 = scmp.ne.s32.totalorder %s97, %s100
      %p106 = scmp.eq.s32.totalorder %s9, 0
      %p107 = por %p105, %p106
      %p108 = scmp.ne.s32.totalorder %s97, %s100
      %p109 = scmp.eq.s32.totalorder %s14, 3
      %p110 = por %p108, %p109
      %p111 = scmp.ne.s32.totalorder %s100, %s101
      %p112 = scmp.eq.s32.totalorder %s14, 0
      %p113 = por %p111, %p112
      %p114 = scmp.ne.s32.totalorder %s100, %s101
      %p115 = scmp.eq.s32.totalorder %s15, 3
      %p116 = por %p114, %p115
      %p118 = scmp.ne.s32.totalorder %s101, %s117
      %p119 = scmp.eq.s32.totalorder %s15, 0
      %p120 = por %p118, %p119
      %p121 = scmp.le.s32.totalorder 1, %s9
      %p122 = scmp.lt.s32.totalorder %s9, 5
      %p123 = pnand %p121, %p122
      %p124 = pneg %p123
      // Predicated region
      $region9: #{tpu_custom_call.1} parent=5 // pred_check
        _
      $region10: #{tpu_custom_call.1} parent=5 // pred_check_branch
        %126 = sbr.rel (%p123) target = $region12
      $region11: #{tpu_custom_call.1} parent=5 // pred_region
        %s127 = ssub.s32 %s9, 1
      $region12: #{tpu_custom_call.1} parent=5 // pred_fallthru
        _
      %p128 = scmp.lt.s32.totalorder %s9, 4
      // Predicated region
      $region13: #{tpu_custom_call.1} parent=5 // pred_check
        %p129 = pneg %p128
      $region14: #{tpu_custom_call.1} parent=5 // pred_check_branch
        %131 = sbr.rel (%p129) target = $region16
      $region15: #{tpu_custom_call.1} parent=5 // pred_region
        // Predicated region
        $region17: #{tpu_custom_call.1} parent=15 // pred_check
          %p132 = pneg %p29
        $region18: #{tpu_custom_call.1} parent=15 // pred_check_branch
          %134 = sbr.rel (%p132) target = $region20
        $region19: #{tpu_custom_call.1} parent=15 // pred_region
          %s135 = smul.u32 8, %s9
          %s136 = ssub.s32 31, %s135
          %p137 = scmp.lt.s32.totalorder %s136, 8
          %s138 = scalar_select %p137, %s136, 8
          %s139 = smul.u32 8, %s138
          %s140 = smul.u32 %s139, 2
          %p141 = scmp.lt.s32.totalorder %s135, 30
          %s142 = scalar_select %p141, %s135, 30
          %s143 = smul.addr %s142, 2
          %s144 = smul.addr %s143, 8
          %s145 = scalar_lea.vmem %s0, %s144
          %s146 = smul.u32 8, %s9
          %s147 = ssub.s32 31, %s146
          %p148 = scmp.lt.s32.totalorder %s147, 8
          %s149 = scalar_select %p148, %s147, 8
          %s150 = smul.u32 8, %s149
          %s151 = smul.u32 %s150, 2
        $region20: #{tpu_custom_call.1} parent=15 // pred_fallthru
          _
        // Predicated region
        $region21: #{tpu_custom_call.1} parent=15 // pred_check
          %p152 = pneg %p55
        $region22: #{tpu_custom_call.1} parent=15 // pred_check_branch
          %154 = sbr.rel (%p152) target = $region24
        $region23: #{tpu_custom_call.1} parent=15 // pred_region
          %s155 = smul.u32 8, %s9
          %s156 = ssub.s32 31, %s155
          %p157 = scmp.lt.s32.totalorder %s156, 8
          %s158 = scalar_select %p157, %s156, 8
          %s159 = smul.u32 8, %s158
          %p160 = scmp.lt.s32.totalorder %s155, 30
          %s161 = scalar_select %p160, %s155, 30
          %s162 = smul.addr %s161, 8
          %s163 = scalar_lea.vmem %s1, %s162
          %s164 = smul.u32 8, %s9
          %s165 = ssub.s32 31, %s164
          %p166 = scmp.lt.s32.totalorder %s165, 8
          %s167 = scalar_select %p166, %s165, 8
          %s168 = smul.u32 8, %s167
        $region24: #{tpu_custom_call.1} parent=15 // pred_fallthru
          _
        // Predicated region
        $region25: #{tpu_custom_call.1} parent=15 // pred_check
          %p169 = pneg %p81
        $region26: #{tpu_custom_call.1} parent=15 // pred_check_branch
          %171 = sbr.rel (%p169) target = $region28
        $region27: #{tpu_custom_call.1} parent=15 // pred_region
          %s172 = smul.u32 8, %s9
          %s173 = ssub.s32 31, %s172
          %p174 = scmp.lt.s32.totalorder %s173, 8
          %s175 = scalar_select %p174, %s173, 8
          %s176 = smul.u32 8, %s175
          %p177 = scmp.lt.s32.totalorder %s172, 30
          %s178 = scalar_select %p177, %s172, 30
          %s179 = smul.addr %s178, 8
          %s180 = scalar_lea.vmem %s2, %s179
          %s181 = smul.u32 8, %s9
          %s182 = ssub.s32 31, %s181
          %p183 = scmp.lt.s32.totalorder %s182, 8
          %s184 = scalar_select %p183, %s182, 8
          %s185 = smul.u32 8, %s184
        $region28: #{tpu_custom_call.1} parent=15 // pred_fallthru
          _
      $region16: #{tpu_custom_call.1} parent=5 // pred_fallthru
        _
      %p186 = scmp.le.s32.totalorder 1, %s9
      %p187 = scmp.lt.s32.totalorder %s9, 5
      %p188 = pnand %p186, %p187
      %p189 = pneg %p188
      // Predicated region
      $region29: #{tpu_custom_call.1} parent=5 // pred_check
        _
      $region30: #{tpu_custom_call.1} parent=5 // pred_check_branch
        %191 = sbr.rel (%p188) target = $region32
      $region31: #{tpu_custom_call.1} parent=5 // pred_region
        %s192 = ssub.s32 %s9, 1
        %s193 = smul.u32 8, %s14
        %s194 = ssub.s32 31, %s193
        %p195 = scmp.lt.s32.totalorder %s194, 8
        %s196 = scalar_select %p195, %s194, 8
        %s197 = smul.u32 8, %s196
        %s198 = smul.u32 %s197, 2
        %p199 = scmp.lt.s32.totalorder %s193, 30
        %s200 = scalar_select %p199, %s193, 30
        %s201 = smul.addr %s200, 2
        %s202 = smul.addr %s201, 8
        %s203 = scalar_lea.vmem %s0, %s202
        %p204 = pneg %p35
        %p205 = pneg %p32
        %s206 = smul.u32 8, %s14
        %s207 = ssub.s32 31, %s206
        %p208 = scmp.lt.s32.totalorder %s207, 8
        %s209 = scalar_select %p208, %s207, 8
        %s210 = smul.u32 8, %s209
        %p211 = scmp.lt.s32.totalorder %s206, 30
        %s212 = scalar_select %p211, %s206, 30
        %s213 = smul.addr %s212, 8
        %s214 = scalar_lea.vmem %s1, %s213
        %p215 = pneg %p61
        %p216 = pneg %p58
        %s217 = smul.u32 8, %s14
        %s218 = ssub.s32 31, %s217
        %p219 = scmp.lt.s32.totalorder %s218, 8
        %s220 = scalar_select %p219, %s218, 8
        %s221 = smul.u32 8, %s220
        %p222 = scmp.lt.s32.totalorder %s217, 30
        %s223 = scalar_select %p222, %s217, 30
        %s224 = smul.addr %s223, 8
        %s225 = scalar_lea.vmem %s2, %s224
        %p226 = pneg %p87
        %p227 = pneg %p84
        %p228 = pneg %p113
        %p229 = pneg %p110
        %s230 = sand.u32 %s100, 1
        %s231 = sand.u32 %s100, 1
        %s232 = smul.addr %s231, 128
        %s233 = scalar_lea.vmem [#allocation2], %s232
        %s234 = smul.u32 8, %s14
        %s235 = ssub.s32 31, %s234
        %p236 = scmp.lt.s32.totalorder %s235, 8
        %s237 = scalar_select %p236, %s235, 8
        %s238 = smul.u32 8, %s237
        %s239 = smul.u32 %s238, 2
        %p240 = scmp.lt.s32.totalorder %s234, 30
        %s241 = scalar_select %p240, %s234, 30
        %s242 = smul.addr %s241, 2
        %s243 = smul.addr %s242, 8
        %s244 = scalar_lea.vmem %s0, %s243
        %s245 = smul.u32 8, %s14
        %s246 = ssub.s32 31, %s245
        %p247 = scmp.lt.s32.totalorder %s246, 8
        %s248 = scalar_select %p247, %s246, 8
        %s249 = smul.u32 8, %s248
        %s250 = smul.u32 %s249, 2
        %s251 = smul.u32 8, %s14
        %s252 = ssub.s32 31, %s251
        %p253 = scmp.lt.s32.totalorder %s252, 8
        %s254 = scalar_select %p253, %s252, 8
        %s255 = smul.u32 8, %s254
        %p256 = scmp.lt.s32.totalorder %s251, 30
        %s257 = scalar_select %p256, %s251, 30
        %s258 = smul.addr %s257, 8
        %s259 = scalar_lea.vmem %s1, %s258
        %s260 = smul.u32 8, %s14
        %s261 = ssub.s32 31, %s260
        %p262 = scmp.lt.s32.totalorder %s261, 8
        %s263 = scalar_select %p262, %s261, 8
        %s264 = smul.u32 8, %s263
        %s265 = smul.u32 8, %s14
        %s266 = ssub.s32 31, %s265
        %p267 = scmp.lt.s32.totalorder %s266, 8
        %s268 = scalar_select %p267, %s266, 8
        %s269 = smul.u32 8, %s268
        %p270 = scmp.lt.s32.totalorder %s265, 30
        %s271 = scalar_select %p270, %s265, 30
        %s272 = smul.addr %s271, 8
        %s273 = scalar_lea.vmem %s2, %s272
        %s274 = smul.u32 8, %s14
        %s275 = ssub.s32 31, %s274
        %p276 = scmp.lt.s32.totalorder %s275, 8
        %s277 = scalar_select %p276, %s275, 8
        %s278 = smul.u32 8, %s277
        %s279 = smul.u32 8, %s14
        %s280 = ssub.s32 31, %s279
        %p281 = scmp.lt.s32.totalorder %s280, 8
        %s282 = scalar_select %p281, %s280, 8
        %s283 = smul.u32 8, %s282
        %s284 = smul.u32 %s283, 2
        %v285 = vld [vmem:[%s244] sm:$0xff]
        %v286 = vld [vmem:[%s244 + $0x8] sm:$0xff]
        %v287 = vld [vmem:[%s244 + $0x10] sm:$0xff]
        %v288 = vld [vmem:[%s244 + $0x18] sm:$0xff]
        %v289 = vld [vmem:[%s244 + $0x20] sm:$0xff]
        %v290 = vld [vmem:[%s244 + $0x28] sm:$0xff]
        %v291 = vld [vmem:[%s244 + $0x30] sm:$0xff]
        %v292 = vld [vmem:[%s244 + $0x38] sm:$0xff]
        %v293 = vld [vmem:[%s244 + $0x40] sm:$0xff]
        %v294 = vld [vmem:[%s244 + $0x48] sm:$0xff]
        %v295 = vld [vmem:[%s244 + $0x50] sm:$0xff]
        %v296 = vld [vmem:[%s244 + $0x58] sm:$0xff]
        %v297 = vld [vmem:[%s244 + $0x60] sm:$0xff]
        %v298 = vld [vmem:[%s244 + $0x68] sm:$0xff]
        %v299 = vld [vmem:[%s244 + $0x70] sm:$0xff]
        %v300 = vld [vmem:[%s244 + $0x78] sm:$0xff]
        %vm301 = vcmask 556032
        %v302 = vsel %vm301, %v286, 0.0
        %v303 = vadd.f32 %v285, %v302
        %304 = vadd.xlane.f32.xlu0 %v303
        %v305 = vpop.xlane.xlu0 %304
        %v306 = vsel %vm301, %v288, 0.0
        %v307 = vadd.f32 %v287, %v306
        %308 = vadd.xlane.f32.xlu0 %v307
        %v309 = vpop.xlane.xlu0 %308
        %v310 = vsel %vm301, %v290, 0.0
        %v311 = vadd.f32 %v289, %v310
        %312 = vadd.xlane.f32.xlu0 %v311
        %v313 = vpop.xlane.xlu0 %312
        %v314 = vsel %vm301, %v292, 0.0
        %v315 = vadd.f32 %v291, %v314
        %316 = vadd.xlane.f32.xlu0 %v315
        %v317 = vpop.xlane.xlu0 %316
        %v318 = vsel %vm301, %v294, 0.0
        %v319 = vadd.f32 %v293, %v318
        %320 = vadd.xlane.f32.xlu0 %v319
        %v321 = vpop.xlane.xlu0 %320
        %v322 = vsel %vm301, %v296, 0.0
        %v323 = vadd.f32 %v295, %v322
        %324 = vadd.xlane.f32.xlu0 %v323
        %v325 = vpop.xlane.xlu0 %324
        %v326 = vsel %vm301, %v298, 0.0
        %v327 = vadd.f32 %v297, %v326
        %328 = vadd.xlane.f32.xlu0 %v327
        %v329 = vpop.xlane.xlu0 %328
        %v330 = vsel %vm301, %v300, 0.0
        %v331 = vadd.f32 %v299, %v330
        %332 = vadd.xlane.f32.xlu0 %v331
        %v333 = vpop.xlane.xlu0 %332
        %v334 = vmul.f32 %v285, %v285
        %v335 = vmul.f32 %v286, %v286
        %v336 = vmul.f32 %v287, %v287
        %v337 = vmul.f32 %v288, %v288
        %v338 = vmul.f32 %v289, %v289
        %v339 = vmul.f32 %v290, %v290
        %v340 = vmul.f32 %v291, %v291
        %v341 = vmul.f32 %v292, %v292
        %v342 = vmul.f32 %v293, %v293
        %v343 = vmul.f32 %v294, %v294
        %v344 = vmul.f32 %v295, %v295
        %v345 = vmul.f32 %v296, %v296
        %v346 = vmul.f32 %v297, %v297
        %v347 = vmul.f32 %v298, %v298
        %v348 = vmul.f32 %v299, %v299
        %v349 = vmul.f32 %v300, %v300
        %v350 = vsel %vm301, %v335, 0.0
        %v351 = vadd.f32 %v334, %v350
        %352 = vadd.xlane.f32.xlu0 %v351
        %v353 = vpop.xlane.xlu0 %352
        %v354 = vsel %vm301, %v337, 0.0
        %v355 = vadd.f32 %v336, %v354
        %356 = vadd.xlane.f32.xlu0 %v355
        %v357 = vpop.xlane.xlu0 %356
        %v358 = vsel %vm301, %v339, 0.0
        %v359 = vadd.f32 %v338, %v358
        %360 = vadd.xlane.f32.xlu0 %v359
        %v361 = vpop.xlane.xlu0 %360
        %v362 = vsel %vm301, %v341, 0.0
        %v363 = vadd.f32 %v340, %v362
        %364 = vadd.xlane.f32.xlu0 %v363
        %v365 = vpop.xlane.xlu0 %364
        %v366 = vsel %vm301, %v343, 0.0
        %v367 = vadd.f32 %v342, %v366
        %368 = vadd.xlane.f32.xlu0 %v367
        %v369 = vpop.xlane.xlu0 %368
        %v370 = vsel %vm301, %v345, 0.0
        %v371 = vadd.f32 %v344, %v370
        %372 = vadd.xlane.f32.xlu0 %v371
        %v373 = vpop.xlane.xlu0 %372
        %v374 = vsel %vm301, %v347, 0.0
        %v375 = vadd.f32 %v346, %v374
        %376 = vadd.xlane.f32.xlu0 %v375
        %v377 = vpop.xlane.xlu0 %376
        %v378 = vsel %vm301, %v349, 0.0
        %v379 = vadd.f32 %v348, %v378
        %380 = vadd.xlane.f32.xlu0 %v379
        %v381 = vpop.xlane.xlu0 %380
        %v382 = vmul.f32 %v305, 0.0051020407
        %v383 = vmul.f32 %v309, 0.0051020407
        %v384 = vmul.f32 %v313, 0.0051020407
        %v385 = vmul.f32 %v317, 0.0051020407
        %v386 = vmul.f32 %v321, 0.0051020407
        %v387 = vmul.f32 %v325, 0.0051020407
        %v388 = vmul.f32 %v329, 0.0051020407
        %v389 = vmul.f32 %v333, 0.0051020407
        %v390 = vmul.f32 %v353, 0.0051020407
        %v391 = vmul.f32 %v357, 0.0051020407
        %v392 = vmul.f32 %v361, 0.0051020407
        %v393 = vmul.f32 %v365, 0.0051020407
        %v394 = vmul.f32 %v369, 0.0051020407
        %v395 = vmul.f32 %v373, 0.0051020407
        %v396 = vmul.f32 %v377, 0.0051020407
        %v397 = vmul.f32 %v381, 0.0051020407
        %v398 = vmul.f32 %v382, %v382
        %v399 = vmul.f32 %v383, %v383
        %v400 = vmul.f32 %v384, %v384
        %v401 = vmul.f32 %v385, %v385
        %v402 = vmul.f32 %v386, %v386
        %v403 = vmul.f32 %v387, %v387
        %v404 = vmul.f32 %v388, %v388
        %v405 = vmul.f32 %v389, %v389
        %v406 = vsub.f32 %v390, %v398
        %v407 = vsub.f32 %v391, %v399
        %v408 = vsub.f32 %v392, %v400
        %v409 = vsub.f32 %v393, %v401
        %v410 = vsub.f32 %v394, %v402
        %v411 = vsub.f32 %v395, %v403
        %v412 = vsub.f32 %v396, %v404
        %v413 = vsub.f32 %v397, %v405
        %v414 = vadd.f32 %v406, 1e-05
        %v415 = vadd.f32 %v407, 1e-05
        %v416 = vadd.f32 %v408, 1e-05
        %v417 = vadd.f32 %v409, 1e-05
        %v418 = vadd.f32 %v410, 1e-05
        %v419 = vadd.f32 %v411, 1e-05
        %v420 = vadd.f32 %v412, 1e-05
        %v421 = vadd.f32 %v413, 1e-05
        %v422 = vrsqrt.pop %v414
        %v423 = vmul.f32 %v422, %v414
        %v424 = vmul.f32 %v423, %v422
        %v425 = vmul.f32 0.5, %v424
        %v426 = vsub.f32 1.5, %v425
        %v427 = vmul.f32 %v422, %v426
        %vm428 = vweird.f32 %v414
        %vm429 = vweird.f32 %v422
        %vm430 = vmor %vm428, %vm429
        %v431 = vsel %vm430, %v422, %v427
        %v432 = vrsqrt.pop %v415
        %v433 = vmul.f32 %v432, %v415
        %v434 = vmul.f32 %v433, %v432
        %v435 = vmul.f32 0.5, %v434
        %v436 = vsub.f32 1.5, %v435
        %v437 = vmul.f32 %v432, %v436
        %vm438 = vweird.f32 %v415
        %vm439 = vweird.f32 %v432
        %vm440 = vmor %vm438, %vm439
        %v441 = vsel %vm440, %v432, %v437
        %v442 = vrsqrt.pop %v416
        %v443 = vmul.f32 %v442, %v416
        %v444 = vmul.f32 %v443, %v442
        %v445 = vmul.f32 0.5, %v444
        %v446 = vsub.f32 1.5, %v445
        %v447 = vmul.f32 %v442, %v446
        %vm448 = vweird.f32 %v416
        %vm449 = vweird.f32 %v442
        %vm450 = vmor %vm448, %vm449
        %v451 = vsel %vm450, %v442, %v447
        %v452 = vrsqrt.pop %v417
        %v453 = vmul.f32 %v452, %v417
        %v454 = vmul.f32 %v453, %v452
        %v455 = vmul.f32 0.5, %v454
        %v456 = vsub.f32 1.5, %v455
        %v457 = vmul.f32 %v452, %v456
        %vm458 = vweird.f32 %v417
        %vm459 = vweird.f32 %v452
        %vm460 = vmor %vm458, %vm459
        %v461 = vsel %vm460, %v452, %v457
        %v462 = vrsqrt.pop %v418
        %v463 = vmul.f32 %v462, %v418
        %v464 = vmul.f32 %v463, %v462
        %v465 = vmul.f32 0.5, %v464
        %v466 = vsub.f32 1.5, %v465
        %v467 = vmul.f32 %v462, %v466
        %vm468 = vweird.f32 %v418
        %vm469 = vweird.f32 %v462
        %vm470 = vmor %vm468, %vm469
        %v471 = vsel %vm470, %v462, %v467
        %v472 = vrsqrt.pop %v419
        %v473 = vmul.f32 %v472, %v419
        %v474 = vmul.f32 %v473, %v472
        %v475 = vmul.f32 0.5, %v474
        %v476 = vsub.f32 1.5, %v475
        %v477 = vmul.f32 %v472, %v476
        %vm478 = vweird.f32 %v419
        %vm479 = vweird.f32 %v472
        %vm480 = vmor %vm478, %vm479
        %v481 = vsel %vm480, %v472, %v477
        %v482 = vrsqrt.pop %v420
        %v483 = vmul.f32 %v482, %v420
        %v484 = vmul.f32 %v483, %v482
        %v485 = vmul.f32 0.5, %v484
        %v486 = vsub.f32 1.5, %v485
        %v487 = vmul.f32 %v482, %v486
        %vm488 = vweird.f32 %v420
        %vm489 = vweird.f32 %v482
        %vm490 = vmor %vm488, %vm489
        %v491 = vsel %vm490, %v482, %v487
        %v492 = vrsqrt.pop %v421
        %v493 = vmul.f32 %v492, %v421
        %v494 = vmul.f32 %v493, %v492
        %v495 = vmul.f32 0.5, %v494
        %v496 = vsub.f32 1.5, %v495
        %v497 = vmul.f32 %v492, %v496
        %vm498 = vweird.f32 %v421
        %vm499 = vweird.f32 %v492
        %vm500 = vmor %vm498, %vm499
        %v501 = vsel %vm500, %v492, %v497
        %v502 = vld [vmem:[%s259] sm:$0xff]
        %v503 = vld [vmem:[%s259 + $0x8] sm:$0xff]
        %v504 = vld [vmem:[%s259 + $0x10] sm:$0xff]
        %v505 = vld [vmem:[%s259 + $0x18] sm:$0xff]
        %v506 = vld [vmem:[%s259 + $0x20] sm:$0xff]
        %v507 = vld [vmem:[%s259 + $0x28] sm:$0xff]
        %v508 = vld [vmem:[%s259 + $0x30] sm:$0xff]
        %v509 = vld [vmem:[%s259 + $0x38] sm:$0xff]
        %v510 = vmul.f32 %v502, %v431
        %v511 = vmul.f32 %v503, %v441
        %v512 = vmul.f32 %v504, %v451
        %v513 = vmul.f32 %v505, %v461
        %v514 = vmul.f32 %v506, %v471
        %v515 = vmul.f32 %v507, %v481
        %v516 = vmul.f32 %v508, %v491
        %v517 = vmul.f32 %v509, %v501
        %v518 = vld [vmem:[%s273] sm:$0xff]
        %v519 = vld [vmem:[%s273 + $0x8] sm:$0xff]
        %v520 = vld [vmem:[%s273 + $0x10] sm:$0xff]
        %v521 = vld [vmem:[%s273 + $0x18] sm:$0xff]
        %v522 = vld [vmem:[%s273 + $0x20] sm:$0xff]
        %v523 = vld [vmem:[%s273 + $0x28] sm:$0xff]
        %v524 = vld [vmem:[%s273 + $0x30] sm:$0xff]
        %v525 = vld [vmem:[%s273 + $0x38] sm:$0xff]
        %v526 = vmul.f32 %v382, %v510
        %v527 = vmul.f32 %v383, %v511
        %v528 = vmul.f32 %v384, %v512
        %v529 = vmul.f32 %v385, %v513
        %v530 = vmul.f32 %v386, %v514
        %v531 = vmul.f32 %v387, %v515
        %v532 = vmul.f32 %v388, %v516
        %v533 = vmul.f32 %v389, %v517
        %v534 = vsub.f32 %v518, %v526
        %v535 = vsub.f32 %v519, %v527
        %v536 = vsub.f32 %v520, %v528
        %v537 = vsub.f32 %v521, %v529
        %v538 = vsub.f32 %v522, %v530
        %v539 = vsub.f32 %v523, %v531
        %v540 = vsub.f32 %v524, %v532
        %v541 = vsub.f32 %v525, %v533
        %543 = vset.pattern.permute.xlu0 0
        %544 = vperm.xlu0 %543, %v510
        %v545 = vpop.permute.xlu0 %544
        %548 = vset.pattern.permute.xlu0 0
        %549 = vperm.xlu0 %548, %v511
        %v550 = vpop.permute.xlu0 %549
        %553 = vset.pattern.permute.xlu0 0
        %554 = vperm.xlu0 %553, %v512
        %v555 = vpop.permute.xlu0 %554
        %558 = vset.pattern.permute.xlu0 0
        %559 = vperm.xlu0 %558, %v513
        %v560 = vpop.permute.xlu0 %559
        %563 = vset.pattern.permute.xlu0 0
        %564 = vperm.xlu0 %563, %v514
        %v565 = vpop.permute.xlu0 %564
        %568 = vset.pattern.permute.xlu0 0
        %569 = vperm.xlu0 %568, %v515
        %v570 = vpop.permute.xlu0 %569
        %573 = vset.pattern.permute.xlu0 0
        %574 = vperm.xlu0 %573, %v516
        %v575 = vpop.permute.xlu0 %574
        %578 = vset.pattern.permute.xlu0 0
        %579 = vperm.xlu0 %578, %v517
        %v580 = vpop.permute.xlu0 %579
        %v582 = vmul.f32 %v285, %v545
        %v583 = vmul.f32 %v286, %v545
        %v584 = vmul.f32 %v287, %v550
        %v585 = vmul.f32 %v288, %v550
        %v586 = vmul.f32 %v289, %v555
        %v587 = vmul.f32 %v290, %v555
        %v588 = vmul.f32 %v291, %v560
        %v589 = vmul.f32 %v292, %v560
        %v590 = vmul.f32 %v293, %v565
        %v591 = vmul.f32 %v294, %v565
        %v592 = vmul.f32 %v295, %v570
        %v593 = vmul.f32 %v296, %v570
        %v594 = vmul.f32 %v297, %v575
        %v595 = vmul.f32 %v298, %v575
        %v596 = vmul.f32 %v299, %v580
        %v597 = vmul.f32 %v300, %v580
        %599 = vset.pattern.permute.xlu0 0
        %600 = vperm.xlu0 %599, %v534
        %v601 = vpop.permute.xlu0 %600
        %604 = vset.pattern.permute.xlu0 0
        %605 = vperm.xlu0 %604, %v535
        %v606 = vpop.permute.xlu0 %605
        %609 = vset.pattern.permute.xlu0 0
        %610 = vperm.xlu0 %609, %v536
        %v611 = vpop.permute.xlu0 %610
        %614 = vset.pattern.permute.xlu0 0
        %615 = vperm.xlu0 %614, %v537
        %v616 = vpop.permute.xlu0 %615
        %619 = vset.pattern.permute.xlu0 0
        %620 = vperm.xlu0 %619, %v538
        %v621 = vpop.permute.xlu0 %620
        %624 = vset.pattern.permute.xlu0 0
        %625 = vperm.xlu0 %624, %v539
        %v626 = vpop.permute.xlu0 %625
        %629 = vset.pattern.permute.xlu0 0
        %630 = vperm.xlu0 %629, %v540
        %v631 = vpop.permute.xlu0 %630
        %634 = vset.pattern.permute.xlu0 0
        %635 = vperm.xlu0 %634, %v541
        %v636 = vpop.permute.xlu0 %635
        %v638 = vadd.f32 %v582, %v601
        %v639 = vadd.f32 %v583, %v601
        %v640 = vadd.f32 %v584, %v606
        %v641 = vadd.f32 %v585, %v606
        %v642 = vadd.f32 %v586, %v611
        %v643 = vadd.f32 %v587, %v611
        %v644 = vadd.f32 %v588, %v616
        %v645 = vadd.f32 %v589, %v616
        %v646 = vadd.f32 %v590, %v621
        %v647 = vadd.f32 %v591, %v621
        %v648 = vadd.f32 %v592, %v626
        %v649 = vadd.f32 %v593, %v626
        %v650 = vadd.f32 %v594, %v631
        %v651 = vadd.f32 %v595, %v631
        %v652 = vadd.f32 %v596, %v636
        %v653 = vadd.f32 %v597, %v636
        %654 = vst [vmem:[%s233] sm:$0xff] %v638
        %655 = vst.msk [vmem:[%s233 + $0x8] sm:$0xff] %vm301, %v639
        %656 = vst [vmem:[%s233 + $0x10] sm:$0xff] %v640
        %657 = vst.msk [vmem:[%s233 + $0x18] sm:$0xff] %vm301, %v641
        %658 = vst [vmem:[%s233 + $0x20] sm:$0xff] %v642
        %659 = vst.msk [vmem:[%s233 + $0x28] sm:$0xff] %vm301, %v643
        %660 = vst [vmem:[%s233 + $0x30] sm:$0xff] %v644
        %661 = vst.msk [vmem:[%s233 + $0x38] sm:$0xff] %vm301, %v645
        %662 = vst [vmem:[%s233 + $0x40] sm:$0xff] %v646
        %663 = vst.msk [vmem:[%s233 + $0x48] sm:$0xff] %vm301, %v647
        %664 = vst [vmem:[%s233 + $0x50] sm:$0xff] %v648
        %665 = vst.msk [vmem:[%s233 + $0x58] sm:$0xff] %vm301, %v649
        %666 = vst [vmem:[%s233 + $0x60] sm:$0xff] %v650
        %667 = vst.msk [vmem:[%s233 + $0x68] sm:$0xff] %vm301, %v651
        %668 = vst [vmem:[%s233 + $0x70] sm:$0xff] %v652
        %669 = vst.msk [vmem:[%s233 + $0x78] sm:$0xff] %vm301, %v653
        %s670 = sand.u32 %s100, 1
        %s671 = sand.u32 %s100, 1
        %s672 = smul.addr %s671, 128
        %s673 = scalar_lea.vmem [#allocation2], %s672
        // Predicated region
        $region33: #{tpu_custom_call.1} parent=31 // pred_check
          %p674 = pneg %p110
        $region34: #{tpu_custom_call.1} parent=31 // pred_check_branch
          %676 = sbr.rel (%p674) target = $region36
        $region35: #{tpu_custom_call.1} parent=31 // pred_region
          %s677 = smul.u32 8, %s14
          %s678 = ssub.s32 31, %s677
          %p679 = scmp.lt.s32.totalorder %s678, 8
          %s680 = scalar_select %p679, %s678, 8
          %s681 = smul.u32 8, %s680
          %s682 = smul.u32 %s681, 2
          %p683 = scmp.ne.s32.totalorder 0, %s682
          %s684 = smul.addr %s677, 2
          %s685 = smul.addr %s684, 8
          %s686 = scalar_lea.vmem %s3, %s685
          // Predicated region
          $region37: #{tpu_custom_call.1} parent=35 // pred_check
            %p687 = pneg %p683
          $region38: #{tpu_custom_call.1} parent=35 // pred_check_branch
            %689 = sbr.rel (%p687) target = $region40
          $region39: #{tpu_custom_call.1} parent=35 // pred_region
            // Predicated region
            $region41: #{tpu_custom_call.1} parent=39 // pred_check
              _
            $region42: #{tpu_custom_call.1} parent=39 // pred_check_branch
              %691 = sbr.rel (0) target = $region44
            $region43: #{tpu_custom_call.1} parent=39 // pred_region
              %s692 = sshrl.u32 %s680, 3
              // While loop
              $region45: #{tpu_custom_call.1} parent=43 // loop_pre_header
                _
              $region46: #{tpu_custom_call.1} parent=43 // loop_header
                %s694 = sphi 0, %s696
                %p695 = scmp.ge.s32.totalorder %s694, %s692
                %s699 = sphi 0, %s736
                %s700 = sphi %s673, %s739
                %s701 = sphi %s686, %s740
              $region47: #{tpu_custom_call.1} parent=43 // loop_header_branch
                %698 = sbr.rel (%p695) target = $region51
              $region48: #{tpu_custom_call.1} parent=43 // loop_body
                %v702 = vld [vmem:[%s700] sm:$0xff]
                %703 = vst [vmem:[%s701] sm:$0xff] %v702
                %v704 = vld [vmem:[%s700 + $0x10] sm:$0xff]
                %705 = vst [vmem:[%s701 + $0x10] sm:$0xff] %v704
                %v706 = vld [vmem:[%s700 + $0x20] sm:$0xff]
                %707 = vst [vmem:[%s701 + $0x20] sm:$0xff] %v706
                %v708 = vld [vmem:[%s700 + $0x30] sm:$0xff]
                %709 = vst [vmem:[%s701 + $0x30] sm:$0xff] %v708
                %v710 = vld [vmem:[%s700 + $0x40] sm:$0xff]
                %711 = vst [vmem:[%s701 + $0x40] sm:$0xff] %v710
                %v712 = vld [vmem:[%s700 + $0x50] sm:$0xff]
                %713 = vst [vmem:[%s701 + $0x50] sm:$0xff] %v712
                %v714 = vld [vmem:[%s700 + $0x60] sm:$0xff]
                %715 = vst [vmem:[%s701 + $0x60] sm:$0xff] %v714
                %v716 = vld [vmem:[%s700 + $0x70] sm:$0xff]
                %717 = vst [vmem:[%s701 + $0x70] sm:$0xff] %v716
                %v718 = vld [vmem:[%s700 + $0x8] sm:$0xff]
                %719 = vst [vmem:[%s701 + $0x8] sm:$0xff] %v718
                %v720 = vld [vmem:[%s700 + $0x18] sm:$0xff]
                %721 = vst [vmem:[%s701 + $0x18] sm:$0xff] %v720
                %v722 = vld [vmem:[%s700 + $0x28] sm:$0xff]
                %723 = vst [vmem:[%s701 + $0x28] sm:$0xff] %v722
                %v724 = vld [vmem:[%s700 + $0x38] sm:$0xff]
                %725 = vst [vmem:[%s701 + $0x38] sm:$0xff] %v724
                %v726 = vld [vmem:[%s700 + $0x48] sm:$0xff]
                %727 = vst [vmem:[%s701 + $0x48] sm:$0xff] %v726
                %v728 = vld [vmem:[%s700 + $0x58] sm:$0xff]
                %729 = vst [vmem:[%s701 + $0x58] sm:$0xff] %v728
                %v730 = vld [vmem:[%s700 + $0x68] sm:$0xff]
                %731 = vst [vmem:[%s701 + $0x68] sm:$0xff] %v730
                %v732 = vld [vmem:[%s700 + $0x78] sm:$0xff]
                %733 = vst [vmem:[%s701 + $0x78] sm:$0xff] %v732
                %s734 = sadd.s32 1, %s699
                %p735 = scmp.ge.s32.totalorder %s734, %s692
                %s736 = scalar_select %p735, 0, %s734
                %s737 = smul.u32 %s736, 128
                %s738 = smul.u32 %s736, 128
                %s739 = scalar_lea.vmem %s673, %s737 [#allocation2]
                %s740 = scalar_lea.vmem %s686, %s738
              $region49: #{tpu_custom_call.1} parent=43 // loop_footer
                %s696 = sadd.s32 %s694, 1
              $region50: #{tpu_custom_call.1} parent=43 // loop_footer_branch
                %693 = sbr.rel target = $region46
              $region51: #{tpu_custom_call.1} parent=43 // loop_exit
                _
              %s741 = sshrl.u32 %s680, 3
              %s742 = sand.u32 %s680, 7
              %s743 = smul.u32 %s741, 8
              %s744 = smul.u32 16, %s743
              %s745 = scalar_lea.vmem %s673, %s744 [#allocation2]
              %s746 = smul.u32 16, %s743
              %s747 = scalar_lea.vmem %s686, %s746
              // While loop
              $region52: #{tpu_custom_call.1} parent=43 // loop_pre_header
                _
              $region53: #{tpu_custom_call.1} parent=43 // loop_header
                %s749 = sphi 0, %s751
                %p750 = scmp.ge.s32.totalorder %s749, %s742
                %s754 = sphi 0, %s763
                %s755 = sphi %s745, %s766
                %s756 = sphi %s747, %s767
              $region54: #{tpu_custom_call.1} parent=43 // loop_header_branch
                %753 = sbr.rel (%p750) target = $region58
              $region55: #{tpu_custom_call.1} parent=43 // loop_body
                %v757 = vld [vmem:[%s755] sm:$0xff]
                %758 = vst [vmem:[%s756] sm:$0xff] %v757
                %v759 = vld [vmem:[%s755 + $0x8] sm:$0xff]
                %760 = vst [vmem:[%s756 + $0x8] sm:$0xff] %v759
                %s761 = sadd.s32 1, %s754
                %p762 = scmp.ge.s32.totalorder %s761, %s742
                %s763 = scalar_select %p762, 0, %s761
                %s764 = smul.u32 %s763, 16
                %s765 = smul.u32 %s763, 16
                %s766 = scalar_lea.vmem %s745, %s764 [#allocation2]
                %s767 = scalar_lea.vmem %s747, %s765
              $region56: #{tpu_custom_call.1} parent=43 // loop_footer
                %s751 = sadd.s32 %s749, 1
              $region57: #{tpu_custom_call.1} parent=43 // loop_footer_branch
                %748 = sbr.rel target = $region53
              $region58: #{tpu_custom_call.1} parent=43 // loop_exit
                _
            $region44: #{tpu_custom_call.1} parent=39 // pred_fallthru
              _
            // Predicated region
            $region59: #{tpu_custom_call.1} parent=39 // pred_check
              _
            $region60: #{tpu_custom_call.1} parent=39 // pred_check_branch
              %769 = sbr.rel target = $region62
            $region61: #{tpu_custom_call.1} parent=39 // pred_region
              _
            $region62: #{tpu_custom_call.1} parent=39 // pred_fallthru
              _
          $region40: #{tpu_custom_call.1} parent=35 // pred_fallthru
            _
          %770 = vnop
        $region36: #{tpu_custom_call.1} parent=31 // pred_fallthru
          _
      $region32: #{tpu_custom_call.1} parent=5 // pred_fallthru
        _
      %p771 = scmp.le.s32.totalorder 2, %s9
      // Predicated region
      $region63: #{tpu_custom_call.1} parent=5 // pred_check
        %p772 = pneg %p771
      $region64: #{tpu_custom_call.1} parent=5 // pred_check_branch
        %774 = sbr.rel (%p772) target = $region66
      $region65: #{tpu_custom_call.1} parent=5 // pred_region
        %s775 = ssub.s32 %s9, 2
        // Predicated region
        $region67: #{tpu_custom_call.1} parent=65 // pred_check
          %p776 = pneg %p116
        $region68: #{tpu_custom_call.1} parent=65 // pred_check_branch
          %778 = sbr.rel (%p776) target = $region70
        $region69: #{tpu_custom_call.1} parent=65 // pred_region
          %s779 = sand.u32 %s101, 1
          %s780 = sand.u32 %s101, 1
          %s781 = smul.addr %s780, 128
          %s782 = scalar_lea.vmem [#allocation2], %s781
        $region70: #{tpu_custom_call.1} parent=65 // pred_fallthru
          _
      $region66: #{tpu_custom_call.1} parent=5 // pred_fallthru
        _
    $region6: #{tpu_custom_call.1} parent=1 // loop_footer
      %s13 = sadd.s32 1, %s9
    $region7: #{tpu_custom_call.1} parent=1 // loop_footer_branch
      %8 = sbr.rel target = $region3
    $region8: #{tpu_custom_call.1} parent=1 // loop_exit
      _

</llo_original>
